<compile_context>
chip_gen: v7x
topology: tpu7x:2x2x1
jax: 0.10.0
libtpu: 0.0.40
codegen_flags: <defaults>
</compile_context>

<pallas_src>
import functools

import jax
import jax.numpy as jnp
from jax.experimental import pallas as pl
from jax.experimental.pallas import tpu as pltpu


def _class_attn_kernel(x_ref, wq_ref, wk_ref, wv_ref, wp_ref, bp_ref,
                       hmask_ref, kbias_ref,
                       xcls_ref, attn_ref,
                       *, batch_tile, seq_len, channels, num_heads,
                       approx_recip):
    bt, n, c, h = batch_tile, seq_len, channels, num_heads
    del h  # head count is implicit in hmask / attn_ref shapes

    x = x_ref[...]                                    # (bt, n, c), compute dtype
    cdt = x.dtype
    x2d = x.reshape(bt * n, c)                        # layout-free (n % 128 == 0)

    # K / V projections: (bt*n, c) x (c, c), f32 accumulation, kept in cdt for
    # the attention matmuls below.
    k = jnp.dot(x2d, wk_ref[...],
                preferred_element_type=jnp.float32).astype(cdt)
    v = jnp.dot(x2d, wv_ref[...],
                preferred_element_type=jnp.float32).astype(cdt)
    k3 = k.reshape(bt, n, c)
    v3 = v.reshape(bt, n, c)

    # Class-token Q projection (scale pre-folded into wq_t): (bt, c).
    cls_tok = x[:, 0, :]
    q = jnp.dot(cls_tok, wq_ref[...], preferred_element_type=jnp.float32)

    # Per-head Q via precomputed head mask: qh[b,h,c] = q[b,c] * hmask[h,c].
    hmask = hmask_ref[...]                            # (H, c) f32, exact 0/1
    qh = (q[:, None, :] * hmask[None, :, :]).astype(cdt)       # (bt, H, c)

    # logits[b,h,n] = sum_c qh[b,h,c] * k[b,n,c]  -- one batched MXU matmul.
    logits = jnp.einsum('bhc,bnc->bhn', qh, k3,
                        preferred_element_type=jnp.float32)    # (bt, H, n) f32

    # attn_o is the PRE-softmax logits (matches PyTorch `attn_o = attn`);
    # single lane-dense full-tile store.
    attn_ref[...] = logits.astype(attn_ref.dtype)

    # Softmax over keys in f32; padded keys get a precomputed -1e30 bias.
    logits = logits + kbias_ref[...][None, :, :]      # (1,1,n) broadcast
    m = jnp.max(logits, axis=-1, keepdims=True)
    e = jnp.exp(logits - m)
    s = jnp.sum(e, axis=-1, keepdims=True)
    p = e * pl.reciprocal(s, approx=approx_recip)     # EUP slot when approx

    # ctx[b,h,c] = sum_n p[b,h,n] * v[b,n,c]  -- batched MXU matmul.
    ctx = jnp.einsum('bhn,bnc->bhc', p.astype(cdt), v3,
                     preferred_element_type=jnp.float32)       # (bt, H, c) f32

    # Gather each channel's own head: sublane reduce, no lane concat.
    cls = jnp.sum(ctx * hmask[None, :, :], axis=1)    # (bt, c) f32

    # Output projection + bias, single full-tile store.
    out = jnp.dot(cls.astype(cdt), wp_ref[...],
                  preferred_element_type=jnp.float32) + bp_ref[...]
    xcls_ref[...] = out.reshape(bt, 1, c).astype(xcls_ref.dtype)


def _pick_batch_tile(batch, requested):
    bt = max(1, min(requested, batch))
    while batch % bt:
        bt -= 1
    # v7x has 2 TensorCores; prefer >= 2 grid steps so both stay busy.
    if batch // bt < 2 and bt > 1:
        bt2 = bt // 2
        while bt2 > 1 and batch % bt2:
            bt2 -= 1
        bt = max(1, bt2)
    return bt


def class_attention(x, wq, wk, wv, wp, bp, *, num_heads, batch_tile=8,
                    compute_dtype=jnp.bfloat16):
    B, N, C = x.shape
    assert C % num_heads == 0
    head_dim = C // num_heads
    scale = head_dim ** (-0.5)

    bt = _pick_batch_tile(B, batch_tile)

    # Pad N to a multiple of 128: lane-dense attn store, layout-free reshapes.
    n_pad = ((N + 127) // 128) * 128
    x_p = x if n_pad == N else jnp.pad(x, ((0, 0), (0, n_pad - N), (0, 0)))
    x_p = x_p.astype(compute_dtype)

    # One-time wrapper-side weight prep (no in-kernel transposes).
    wq_t = (wq.astype(jnp.float32) * scale).T.astype(compute_dtype)   # (C, C)
    wk_t = wk.T.astype(compute_dtype)                                 # (C, C)
    wv_t = wv.T.astype(compute_dtype)                                 # (C, C)
    wp_t = wp.T.astype(compute_dtype)                                 # (C, C)
    bp2 = bp.reshape(1, C).astype(jnp.float32)

    # head_mask[h, ch] = 1.0 iff channel ch belongs to head h (hoisted).
    hmask = (jnp.arange(C)[None, :] // head_dim
             == jnp.arange(num_heads)[:, None]).astype(jnp.float32)   # (H, C)

    # Additive key bias: 0 for real keys, -1e30 for padded keys (hoisted).
    kbias = jnp.where(jnp.arange(n_pad)[None, :] < N,
                      0.0, -1e30).astype(jnp.float32)                 # (1, n_pad)

    kernel = functools.partial(
        _class_attn_kernel, batch_tile=bt, seq_len=n_pad, channels=C,
        num_heads=num_heads, approx_recip=(compute_dtype != jnp.float32))

    # Explicit VMEM budget (cap below v7x's 64 MiB per-TC VMEM).
    itemsize = jnp.dtype(compute_dtype).itemsize
    est = (2 * bt * n_pad * C * itemsize            # double-buffered x tile
           + 4 * C * C * itemsize                   # resident weights
           + 2 * bt * n_pad * C * 4                 # k/v intermediates
           + 2 * bt * num_heads * n_pad * 4         # attn output (dbuf)
           + 2 * bt * C * 4                         # x_cls output (dbuf)
           + (num_heads * C + n_pad + 2 * C) * 4)   # small operands
    vmem_limit = int(min(max(2 * est + (4 << 20), 32 << 20), 60 << 20))

    grid_spec = pltpu.PrefetchScalarGridSpec(
        num_scalar_prefetch=0,
        grid=(B // bt,),
        in_specs=[
            # x: per-grid-step batch tile (pipelined, double-buffered).
            pl.BlockSpec((bt, n_pad, C), lambda i: (i, 0, 0)),
            # Constant operands: whole-array resident VMEM (single buffer).
            pl.BlockSpec(memory_space=pltpu.MemorySpace.VMEM),   # Wq^T * scale
            pl.BlockSpec(memory_space=pltpu.MemorySpace.VMEM),   # Wk^T
            pl.BlockSpec(memory_space=pltpu.MemorySpace.VMEM),   # Wv^T
            pl.BlockSpec(memory_space=pltpu.MemorySpace.VMEM),   # Wp^T
            pl.BlockSpec(memory_space=pltpu.MemorySpace.VMEM),   # proj bias
            pl.BlockSpec(memory_space=pltpu.MemorySpace.VMEM),   # head mask
            pl.BlockSpec(memory_space=pltpu.MemorySpace.VMEM),   # key bias
        ],
        out_specs=[
            pl.BlockSpec((bt, 1, C), lambda i: (i, 0, 0)),            # x_cls
            pl.BlockSpec((bt, num_heads, n_pad), lambda i: (i, 0, 0)),  # logits
        ],
    )

    x_cls, attn = pl.pallas_call(
        kernel,
        out_shape=(
            jax.ShapeDtypeStruct((B, 1, C), x.dtype),
            jax.ShapeDtypeStruct((B, num_heads, n_pad), jnp.float32),
        ),
        grid_spec=grid_spec,
        compiler_params=pltpu.CompilerParams(
            dimension_semantics=("parallel",),
            vmem_limit_bytes=vmem_limit),
    )(x_p, wq_t, wk_t, wv_t, wp_t, bp2, hmask, kbias)

    attn_o = attn[:, :, :N][:, :, None, :]            # (B, H, 1, N)
    return x_cls, attn_o


def _reference(x, wq, wk, wv, wp, bp, *, num_heads):
    """Pure-JAX reference mirroring the PyTorch forward (eval mode)."""
    B, N, C = x.shape
    D = C // num_heads
    scale = D ** (-0.5)
    q = (x[:, 0] @ wq.T).reshape(B, 1, num_heads, D).transpose(0, 2, 1, 3)
    k = (x @ wk.T).reshape(B, N, num_heads, D).transpose(0, 2, 1, 3)
    v = (x @ wv.T).reshape(B, N, num_heads, D).transpose(0, 2, 1, 3)
    q = q * scale
    attn_o = jnp.einsum('bhqd,bhkd->bhqk', q, k)
    attn = jax.nn.softmax(attn_o, axis=-1)
    x_cls = jnp.einsum('bhqk,bhkd->bhqd', attn, v)
    x_cls = x_cls.transpose(0, 2, 1, 3).reshape(B, 1, C)
    x_cls = x_cls @ wp.T + bp
    return x_cls, attn_o


if __name__ == "__main__":
    B, N, C = 2, 8, 32
    num_heads = 4

    key = jax.random.PRNGKey(0)
    k_x, k_q, k_k, k_v, k_p, k_b = jax.random.split(key, 6)

    x = jax.random.normal(k_x, (B, N, C), dtype=jnp.float32)
    # Deterministic synthetic parameters (PyTorch Linear layout: (out, in)).
    wq = 0.05 * jax.random.normal(k_q, (C, C), dtype=jnp.float32)
    wk = 0.05 * jax.random.normal(k_k, (C, C), dtype=jnp.float32)
    wv = 0.05 * jax.random.normal(k_v, (C, C), dtype=jnp.float32)
    wp = 0.05 * jax.random.normal(k_p, (C, C), dtype=jnp.float32)
    bp = 0.01 * jax.random.normal(k_b, (C,), dtype=jnp.float32)

    ref_cls, ref_attn = _reference(x, wq, wk, wv, wp, bp, num_heads=num_heads)

    # 1) f32 compute path: exact parity with the f32 reference.
    x_cls, attn_o = class_attention(x, wq, wk, wv, wp, bp,
                                    num_heads=num_heads,
                                    compute_dtype=jnp.float32)
    jax.block_until_ready((x_cls, attn_o))
    assert x_cls.shape == (B, 1, C)
    assert attn_o.shape == (B, num_heads, 1, N)
    assert jnp.allclose(x_cls, ref_cls, atol=1e-4, rtol=1e-4)
    assert jnp.allclose(attn_o, ref_attn, atol=1e-4, rtol=1e-4)

    # 2) bf16 MXU path (default): f32 accumulation + f32 softmax, looser tol.
    x_cls_bf, attn_bf = class_attention(x, wq, wk, wv, wp, bp,
                                        num_heads=num_heads)
    jax.block_until_ready((x_cls_bf, attn_bf))
    assert x_cls_bf.shape == (B, 1, C)
    assert attn_bf.shape == (B, num_heads, 1, N)
    assert jnp.allclose(x_cls_bf, ref_cls, atol=2e-2, rtol=2e-2)
    assert jnp.allclose(attn_bf, ref_attn, atol=2e-2, rtol=2e-2)

    print("KERNEL_OK")
</pallas_src>

<mosaic_0001>
module attributes {stable_mosaic.version = 11 : i64} {
  func.func @_class_attn_kernel(%arg0: i32, %arg1: memref<1x128x32xf32, #tpu.memory_space<vmem>>, %arg2: memref<32x32xf32, #tpu.memory_space<vmem>>, %arg3: memref<32x32xf32, #tpu.memory_space<vmem>>, %arg4: memref<32x32xf32, #tpu.memory_space<vmem>>, %arg5: memref<32x32xf32, #tpu.memory_space<vmem>>, %arg6: memref<1x32xf32, #tpu.memory_space<vmem>>, %arg7: memref<4x32xf32, #tpu.memory_space<vmem>>, %arg8: memref<1x128xf32, #tpu.memory_space<vmem>>, %arg9: memref<1x1x32xf32, #tpu.memory_space<vmem>>, %arg10: memref<1x4x128xf32, #tpu.memory_space<vmem>>) attributes {dimension_semantics = [#tpu.dimension_semantics<parallel>], iteration_bounds = array<i64: 2>, scalar_prefetch = 0 : i64, scratch_operands = 0 : i64, tpu.core_type = #tpu.core_type<tc>, window_params = [{transform_indices = @transform_0, window_bounds = array<i64: 1, 128, 32>}, {pipeline_mode = #tpu.pipeline_mode<synchronous>, transform_indices = @transform_1, window_bounds = array<i64: 32, 32>}, {pipeline_mode = #tpu.pipeline_mode<synchronous>, transform_indices = @transform_2, window_bounds = array<i64: 32, 32>}, {pipeline_mode = #tpu.pipeline_mode<synchronous>, transform_indices = @transform_3, window_bounds = array<i64: 32, 32>}, {pipeline_mode = #tpu.pipeline_mode<synchronous>, transform_indices = @transform_4, window_bounds = array<i64: 32, 32>}, {pipeline_mode = #tpu.pipeline_mode<synchronous>, transform_indices = @transform_5, window_bounds = array<i64: 1, 32>}, {pipeline_mode = #tpu.pipeline_mode<synchronous>, transform_indices = @transform_6, window_bounds = array<i64: 4, 32>}, {pipeline_mode = #tpu.pipeline_mode<synchronous>, transform_indices = @transform_7, window_bounds = array<i64: 1, 128>}, {transform_indices = @transform_8, window_bounds = array<i64: 1, 1, 32>}, {transform_indices = @transform_9, window_bounds = array<i64: 1, 4, 128>}]} {
    %c0 = arith.constant 0 : index
    %c0_0 = arith.constant 0 : index
    %c0_1 = arith.constant 0 : index
    %0 = vector.load %arg1[%c0, %c0_0, %c0_1] : memref<1x128x32xf32, #tpu.memory_space<vmem>>, vector<1x128x32xf32>
    %1 = vector.shape_cast %0 : vector<1x128x32xf32> to vector<128x32xf32>
    %c0_2 = arith.constant 0 : index
    %c0_3 = arith.constant 0 : index
    %2 = vector.load %arg3[%c0_2, %c0_3] : memref<32x32xf32, #tpu.memory_space<vmem>>, vector<32x32xf32>
    %cst = arith.constant dense<0.000000e+00> : vector<128x32xf32>
    %3 = tpu.matmul %1, %2, %cst {dimension_numbers = #tpu.dot_dimension_numbers<[1], [0], [0], [1], [0, 0, 1, 1], [], []>} : vector<128x32xf32>, vector<32x32xf32>, vector<128x32xf32> -> vector<128x32xf32>
    %c0_4 = arith.constant 0 : index
    %c0_5 = arith.constant 0 : index
    %4 = vector.load %arg4[%c0_4, %c0_5] : memref<32x32xf32, #tpu.memory_space<vmem>>, vector<32x32xf32>
    %cst_6 = arith.constant dense<0.000000e+00> : vector<128x32xf32>
    %5 = tpu.matmul %1, %4, %cst_6 {dimension_numbers = #tpu.dot_dimension_numbers<[1], [0], [0], [1], [0, 0, 1, 1], [], []>} : vector<128x32xf32>, vector<32x32xf32>, vector<128x32xf32> -> vector<128x32xf32>
    %6 = vector.shape_cast %3 : vector<128x32xf32> to vector<1x128x32xf32>
    %7 = vector.shape_cast %5 : vector<128x32xf32> to vector<1x128x32xf32>
    %8 = vector.extract_strided_slice %0 {offsets = [0, 0, 0], sizes = [1, 1, 32], strides = [1, 1, 1]} : vector<1x128x32xf32> to vector<1x1x32xf32>
    %9 = vector.shape_cast %8 : vector<1x1x32xf32> to vector<1x32xf32>
    %c0_7 = arith.constant 0 : index
    %c0_8 = arith.constant 0 : index
    %10 = vector.load %arg2[%c0_7, %c0_8] : memref<32x32xf32, #tpu.memory_space<vmem>>, vector<32x32xf32>
    %cst_9 = arith.constant dense<0.000000e+00> : vector<1x32xf32>
    %11 = tpu.matmul %9, %10, %cst_9 {dimension_numbers = #tpu.dot_dimension_numbers<[1], [0], [0], [1], [0, 0, 1, 1], [], []>} : vector<1x32xf32>, vector<32x32xf32>, vector<1x32xf32> -> vector<1x32xf32>
    %c0_10 = arith.constant 0 : index
    %c0_11 = arith.constant 0 : index
    %12 = vector.load %arg7[%c0_10, %c0_11] : memref<4x32xf32, #tpu.memory_space<vmem>>, vector<4x32xf32>
    %13 = vector.shape_cast %11 : vector<1x32xf32> to vector<1x1x32xf32>
    %14 = vector.shape_cast %12 : vector<4x32xf32> to vector<1x4x32xf32>
    %15 = vector.broadcast %13 : vector<1x1x32xf32> to vector<1x4x32xf32>
    %16 = arith.mulf %15, %14 : vector<1x4x32xf32>
    "tpu.trace_start"() <{level = 10 : i32, message = "bhc,bnc->bhn"}> : () -> ()
    %cst_12 = arith.constant dense<0.000000e+00> : vector<1x4x128xf32>
    %17 = tpu.matmul %16, %6, %cst_12 {dimension_numbers = #tpu.dot_dimension_numbers<[2], [2], [1], [1], [0, 0, 0, 1, 1, 1], [0], [0]>} : vector<1x4x32xf32>, vector<1x128x32xf32>, vector<1x4x128xf32> -> vector<1x4x128xf32>
    "tpu.trace_stop"() : () -> ()
    %c0_13 = arith.constant 0 : index
    %c0_14 = arith.constant 0 : index
    %c0_15 = arith.constant 0 : index
    %18 = vector.load %arg10[%c0_13, %c0_14, %c0_15] : memref<1x4x128xf32, #tpu.memory_space<vmem>>, vector<1x4x128xf32>
    tpu.vector_store %arg10[%c0_13, %c0_14, %c0_15], %17 {strides = array<i32>} : memref<1x4x128xf32, #tpu.memory_space<vmem>>, vector<1x4x128xf32>,
    %c0_16 = arith.constant 0 : index
    %c0_17 = arith.constant 0 : index
    %19 = vector.load %arg8[%c0_16, %c0_17] : memref<1x128xf32, #tpu.memory_space<vmem>>, vector<1x128xf32>
    %20 = vector.shape_cast %19 : vector<1x128xf32> to vector<1x1x128xf32>
    %21 = vector.broadcast %20 : vector<1x1x128xf32> to vector<1x4x128xf32>
    %22 = arith.addf %17, %21 : vector<1x4x128xf32>
    %cst_18 = arith.constant dense<0xFF800000> : vector<1x4xf32>
    %23 = vector.multi_reduction <maximumf>, %22, %cst_18 [2] : vector<1x4x128xf32> to vector<1x4xf32>
    %24 = vector.shape_cast %23 : vector<1x4xf32> to vector<1x4x1xf32>
    %25 = vector.broadcast %24 : vector<1x4x1xf32> to vector<1x4x128xf32>
    %26 = arith.subf %22, %25 : vector<1x4x128xf32>
    %27 = math.exp %26 : vector<1x4x128xf32>
    %cst_19 = arith.constant dense<0.000000e+00> : vector<1x4xf32>
    %28 = vector.multi_reduction <add>, %27, %cst_19 [2] : vector<1x4x128xf32> to vector<1x4xf32>
    %29 = vector.shape_cast %28 : vector<1x4xf32> to vector<1x4x1xf32>
    %30 = tpu.reciprocal %29 : vector<1x4x1xf32> -> vector<1x4x1xf32>
    %31 = vector.broadcast %30 : vector<1x4x1xf32> to vector<1x4x128xf32>
    %32 = arith.mulf %27, %31 : vector<1x4x128xf32>
    "tpu.trace_start"() <{level = 10 : i32, message = "bhn,bnc->bhc"}> : () -> ()
    %cst_20 = arith.constant dense<0.000000e+00> : vector<1x4x32xf32>
    %33 = tpu.matmul %32, %7, %cst_20 {dimension_numbers = #tpu.dot_dimension_numbers<[2], [1], [1], [2], [0, 0, 0, 1, 1, 2], [0], [0]>} : vector<1x4x128xf32>, vector<1x128x32xf32>, vector<1x4x32xf32> -> vector<1x4x32xf32>
    "tpu.trace_stop"() : () -> ()
    %34 = vector.shape_cast %12 : vector<4x32xf32> to vector<1x4x32xf32>
    %35 = arith.mulf %33, %34 : vector<1x4x32xf32>
    %cst_21 = arith.constant dense<0.000000e+00> : vector<1x32xf32>
    %36 = vector.multi_reduction <add>, %35, %cst_21 [1] : vector<1x4x32xf32> to vector<1x32xf32>
    %c0_22 = arith.constant 0 : index
    %c0_23 = arith.constant 0 : index
    %37 = vector.load %arg5[%c0_22, %c0_23] : memref<32x32xf32, #tpu.memory_space<vmem>>, vector<32x32xf32>
    %cst_24 = arith.constant dense<0.000000e+00> : vector<1x32xf32>
    %38 = tpu.matmul %36, %37, %cst_24 {dimension_numbers = #tpu.dot_dimension_numbers<[1], [0], [0], [1], [0, 0, 1, 1], [], []>} : vector<1x32xf32>, vector<32x32xf32>, vector<1x32xf32> -> vector<1x32xf32>
    %c0_25 = arith.constant 0 : index
    %c0_26 = arith.constant 0 : index
    %39 = vector.load %arg6[%c0_25, %c0_26] : memref<1x32xf32, #tpu.memory_space<vmem>>, vector<1x32xf32>
    %40 = arith.addf %38, %39 : vector<1x32xf32>
    %41 = vector.shape_cast %40 : vector<1x32xf32> to vector<1x1x32xf32>
    %c0_27 = arith.constant 0 : index
    %c0_28 = arith.constant 0 : index
    %c0_29 = arith.constant 0 : index
    %42 = vector.load %arg9[%c0_27, %c0_28, %c0_29] : memref<1x1x32xf32, #tpu.memory_space<vmem>>, vector<1x1x32xf32>
    tpu.vector_store %arg9[%c0_27, %c0_28, %c0_29], %41 {strides = array<i32>} : memref<1x1x32xf32, #tpu.memory_space<vmem>>, vector<1x1x32xf32>,
    return
  }
  func.func @transform_0(%arg0: i32) -> (i32, i32, i32) {
    %c0_i32 = arith.constant 0 : i32
    %c0_i32_0 = arith.constant 0 : i32
    %c0_i32_1 = arith.constant 0 : i32
    return %arg0, %c0_i32, %c0_i32_0 : i32, i32, i32
  }
  func.func @transform_1(%arg0: i32) -> (i32, i32) {
    %c0_i32 = arith.constant 0 : i32
    %c0_i32_0 = arith.constant 0 : i32
    %c0_i32_1 = arith.constant 0 : i32
    return %c0_i32, %c0_i32_0 : i32, i32
  }
  func.func @transform_2(%arg0: i32) -> (i32, i32) {
    %c0_i32 = arith.constant 0 : i32
    %c0_i32_0 = arith.constant 0 : i32
    %c0_i32_1 = arith.constant 0 : i32
    return %c0_i32, %c0_i32_0 : i32, i32
  }
  func.func @transform_3(%arg0: i32) -> (i32, i32) {
    %c0_i32 = arith.constant 0 : i32
    %c0_i32_0 = arith.constant 0 : i32
    %c0_i32_1 = arith.constant 0 : i32
    return %c0_i32, %c0_i32_0 : i32, i32
  }
  func.func @transform_4(%arg0: i32) -> (i32, i32) {
    %c0_i32 = arith.constant 0 : i32
    %c0_i32_0 = arith.constant 0 : i32
    %c0_i32_1 = arith.constant 0 : i32
    return %c0_i32, %c0_i32_0 : i32, i32
  }
  func.func @transform_5(%arg0: i32) -> (i32, i32) {
    %c0_i32 = arith.constant 0 : i32
    %c0_i32_0 = arith.constant 0 : i32
    %c0_i32_1 = arith.constant 0 : i32
    return %c0_i32, %c0_i32_0 : i32, i32
  }
  func.func @transform_6(%arg0: i32) -> (i32, i32) {
    %c0_i32 = arith.constant 0 : i32
    %c0_i32_0 = arith.constant 0 : i32
    %c0_i32_1 = arith.constant 0 : i32
    return %c0_i32, %c0_i32_0 : i32, i32
  }
  func.func @transform_7(%arg0: i32) -> (i32, i32) {
    %c0_i32 = arith.constant 0 : i32
    %c0_i32_0 = arith.constant 0 : i32
    %c0_i32_1 = arith.constant 0 : i32
    return %c0_i32, %c0_i32_0 : i32, i32
  }
  func.func @transform_8(%arg0: i32) -> (i32, i32, i32) {
    %c0_i32 = arith.constant 0 : i32
    %c0_i32_0 = arith.constant 0 : i32
    %c0_i32_1 = arith.constant 0 : i32
    return %arg0, %c0_i32, %c0_i32_0 : i32, i32, i32
  }
  func.func @transform_9(%arg0: i32) -> (i32, i32, i32) {
    %c0_i32 = arith.constant 0 : i32
    %c0_i32_0 = arith.constant 0 : i32
    %c0_i32_1 = arith.constant 0 : i32
    return %arg0, %c0_i32, %c0_i32_0 : i32, i32, i32
  }
}

</mosaic_0001>

<llo_original>
// kernel: tpu_custom_call.1
$region0: #{tpu_custom_call.1}
  #allocation0 [shape = 'u32[]', space=smem, size = 0x4, offset = 0x4, fixed_abs, tag = 'smem constant byte address 0x4 - core index']
  #allocation1 [shape = 'u32[144,128]{1,0:T(1,128)}', space=vmem, size = 0x12000, scoped, tag = 'internal scratch']
  %s0 = inlined_call_operand.vmem [shape: f32[2,128,32], index: 0, kind: input, shape index: {}]
  %s1 = inlined_call_operand.vmem [shape: f32[32,32], index: 1, kind: input, shape index: {}]
  %s2 = inlined_call_operand.vmem [shape: f32[32,32], index: 2, kind: input, shape index: {}]
  %s3 = inlined_call_operand.vmem [shape: f32[32,32], index: 3, kind: input, shape index: {}]
  %s4 = inlined_call_operand.vmem [shape: f32[32,32], index: 4, kind: input, shape index: {}]
  %s5 = inlined_call_operand.vmem [shape: f32[1,32], index: 5, kind: input, shape index: {}]
  %s6 = inlined_call_operand.vmem [shape: f32[4,32], index: 6, kind: input, shape index: {}]
  %s7 = inlined_call_operand.vmem [shape: f32[1,128], index: 7, kind: input, shape index: {}]
  %s8 = inlined_call_operand.hbm [shape: f32[2,1,32], index: 8, kind: output, shape index: {0}]
  %s9 = inlined_call_operand.hbm [shape: f32[2,4,128], index: 9, kind: output, shape index: {1}]
  %10 = xla_tuple %s8, %s9
  %s11 = sld [smem:[#allocation0]]
  $region73: #{tpu_custom_call.1} parent=0
    _
  %s13 = ssub.s32 1, %s11
  %s14 = scalar_select 0, %s13, %s11
  $region1: #{tpu_custom_call.1} parent=0
    #allocation2 [shape = 'u8[1024]{0}', space=vmem, size = 0x400, scoped, tag = 'output window, operand 0']
    #allocation3 [shape = 's32[2]{0}', space=sflag, size = 0x8, scoped, tag = 'scoped memory for tpu_custom_call.1']
    #allocation4 [shape = 'u8[4096]{0}', space=vmem, size = 0x1000, scoped, tag = 'output window, operand 1']
    #allocation5 [shape = 's32[2]{0}', space=sflag, size = 0x8, scoped, tag = 'scoped memory for tpu_custom_call.1']
    %15 = vsyncpa [#allocation3], 0
    %s16 = scalar_lea.sflag [#allocation3], 1
    %17 = vsyncpa %s16, 0
    %18 = vsyncpa [#allocation5], 0
    %s19 = scalar_lea.sflag [#allocation5], 1
    %20 = vsyncpa %s19, 0
    loop: start=0, step=1, limit=4
    $region2: #{tpu_custom_call.1} parent=1 // loop_pre_header
      _
    $region3: #{tpu_custom_call.1} parent=1 // loop_header
      %s22 = sphi 0, %s26
      %p23 = scmp.ge.s32.totalorder %s22, 4
      %s32 = sphi 0, %s34
      %s35 = sphi 0, %s32
      %s36 = sphi 0, %s35
      %s52 = sphi 0, %s36
      %s56 = sphi 0, %s56
      %s58 = sphi 0, %s56
      %s59 = sphi 0, %s58
      %s73 = sphi 0, %s59
      %s77 = sphi 0, %s77
      %s79 = sphi 0, %s77
      %s80 = sphi 0, %s79
      %s94 = sphi 0, %s80
      %s98 = sphi 0, %s98
      %s100 = sphi 0, %s98
      %s101 = sphi 0, %s100
      %s115 = sphi 0, %s101
      %s119 = sphi 0, %s119
      %s121 = sphi 0, %s119
      %s122 = sphi 0, %s121
      %s136 = sphi 0, %s122
      %s140 = sphi 0, %s140
      %s142 = sphi 0, %s140
      %s143 = sphi 0, %s142
      %s157 = sphi 0, %s143
      %s161 = sphi 0, %s161
      %s163 = sphi 0, %s161
      %s164 = sphi 0, %s163
      %s178 = sphi 0, %s164
      %s182 = sphi 0, %s182
      %s184 = sphi 0, %s182
      %s185 = sphi 0, %s184
      %s199 = sphi 0, %s185
      %s205 = sphi 0, %s207
      %s208 = sphi 0, %s205
      %s209 = sphi 0, %s208
      %s225 = sphi 0, %s209
      %s231 = sphi 0, %s233
      %s234 = sphi 0, %s231
      %s235 = sphi 0, %s234
      %s251 = sphi 0, %s235
    $region4: #{tpu_custom_call.1} parent=1 // loop_header_branch
      %25 = sbr.rel (%p23) target = $region8
    $region5: #{tpu_custom_call.1} parent=1 // loop_body
      %s27 = ssub.s32 %s22, 1
      %s28 = ssub.s32 %s22, 2
      %s29 = sadd.s32 %s22, 1
      %s30 = ssub.s32 %s22, %s29
      %p31 = scmp.eq.s32.totalorder %s30, 0
      %s33 = sadd.s32 %s32, 1
      %s34 = scalar_select %p31, %s32, %s33
      %p37 = pneg %p31
      %p38 = scmp.eq.s32.totalorder %s22, 1
      %p39 = por %p37, %p38
      %p40 = scmp.ne.s32.totalorder %s32, %s35
      %p41 = scmp.eq.s32.totalorder %s22, 0
      %p42 = por %p40, %p41
      %p43 = scmp.ne.s32.totalorder %s32, %s35
      %p44 = scmp.eq.s32.totalorder %s27, 1
      %p45 = por %p43, %p44
      %p46 = scmp.ne.s32.totalorder %s35, %s36
      %p47 = scmp.eq.s32.totalorder %s27, 0
      %p48 = por %p46, %p47
      %p49 = scmp.ne.s32.totalorder %s35, %s36
      %p50 = scmp.eq.s32.totalorder %s28, 1
      %p51 = por %p49, %p50
      %p53 = scmp.ne.s32.totalorder %s36, %s52
      %p54 = scmp.eq.s32.totalorder %s28, 0
      %p55 = por %p53, %p54
      %s57 = sadd.s32 %s56, 1
      %p60 = scmp.eq.s32.totalorder %s22, 1
      %p61 = scmp.ne.s32.totalorder %s56, %s58
      %p62 = scmp.eq.s32.totalorder %s22, 0
      %p63 = por %p61, %p62
      %p64 = scmp.ne.s32.totalorder %s56, %s58
      %p65 = scmp.eq.s32.totalorder %s27, 1
      %p66 = por %p64, %p65
      %p67 = scmp.ne.s32.totalorder %s58, %s59
      %p68 = scmp.eq.s32.totalorder %s27, 0
      %p69 = por %p67, %p68
      %p70 = scmp.ne.s32.totalorder %s58, %s59
      %p71 = scmp.eq.s32.totalorder %s28, 1
      %p72 = por %p70, %p71
      %p74 = scmp.ne.s32.totalorder %s59, %s73
      %p75 = scmp.eq.s32.totalorder %s28, 0
      %p76 = por %p74, %p75
      %s78 = sadd.s32 %s77, 1
      %p81 = scmp.eq.s32.totalorder %s22, 1
      %p82 = scmp.ne.s32.totalorder %s77, %s79
      %p83 = scmp.eq.s32.totalorder %s22, 0
      %p84 = por %p82, %p83
      %p85 = scmp.ne.s32.totalorder %s77, %s79
      %p86 = scmp.eq.s32.totalorder %s27, 1
      %p87 = por %p85, %p86
      %p88 = scmp.ne.s32.totalorder %s79, %s80
      %p89 = scmp.eq.s32.totalorder %s27, 0
      %p90 = por %p88, %p89
      %p91 = scmp.ne.s32.totalorder %s79, %s80
      %p92 = scmp.eq.s32.totalorder %s28, 1
      %p93 = por %p91, %p92
      %p95 = scmp.ne.s32.totalorder %s80, %s94
      %p96 = scmp.eq.s32.totalorder %s28, 0
      %p97 = por %p95, %p96
      %s99 = sadd.s32 %s98, 1
      %p102 = scmp.eq.s32.totalorder %s22, 1
      %p103 = scmp.ne.s32.totalorder %s98, %s100
      %p104 = scmp.eq.s32.totalorder %s22, 0
      %p105 = por %p103, %p104
      %p106 = scmp.ne.s32.totalorder %s98, %s100
      %p107 = scmp.eq.s32.totalorder %s27, 1
      %p108 = por %p106, %p107
      %p109 = scmp.ne.s32.totalorder %s100, %s101
      %p110 = scmp.eq.s32.totalorder %s27, 0
      %p111 = por %p109, %p110
      %p112 = scmp.ne.s32.totalorder %s100, %s101
      %p113 = scmp.eq.s32.totalorder %s28, 1
      %p114 = por %p112, %p113
      %p116 = scmp.ne.s32.totalorder %s101, %s115
      %p117 = scmp.eq.s32.totalorder %s28, 0
      %p118 = por %p116, %p117
      %s120 = sadd.s32 %s119, 1
      %p123 = scmp.eq.s32.totalorder %s22, 1
      %p124 = scmp.ne.s32.totalorder %s119, %s121
      %p125 = scmp.eq.s32.totalorder %s22, 0
      %p126 = por %p124, %p125
      %p127 = scmp.ne.s32.totalorder %s119, %s121
      %p128 = scmp.eq.s32.totalorder %s27, 1
      %p129 = por %p127, %p128
      %p130 = scmp.ne.s32.totalorder %s121, %s122
      %p131 = scmp.eq.s32.totalorder %s27, 0
      %p132 = por %p130, %p131
      %p133 = scmp.ne.s32.totalorder %s121, %s122
      %p134 = scmp.eq.s32.totalorder %s28, 1
      %p135 = por %p133, %p134
      %p137 = scmp.ne.s32.totalorder %s122, %s136
      %p138 = scmp.eq.s32.totalorder %s28, 0
      %p139 = por %p137, %p138
      %s141 = sadd.s32 %s140, 1
      %p144 = scmp.eq.s32.totalorder %s22, 1
      %p145 = scmp.ne.s32.totalorder %s140, %s142
      %p146 = scmp.eq.s32.totalorder %s22, 0
      %p147 = por %p145, %p146
      %p148 = scmp.ne.s32.totalorder %s140, %s142
      %p149 = scmp.eq.s32.totalorder %s27, 1
      %p150 = por %p148, %p149
      %p151 = scmp.ne.s32.totalorder %s142, %s143
      %p152 = scmp.eq.s32.totalorder %s27, 0
      %p153 = por %p151, %p152
      %p154 = scmp.ne.s32.totalorder %s142, %s143
      %p155 = scmp.eq.s32.totalorder %s28, 1
      %p156 = por %p154, %p155
      %p158 = scmp.ne.s32.totalorder %s143, %s157
      %p159 = scmp.eq.s32.totalorder %s28, 0
      %p160 = por %p158, %p159
      %s162 = sadd.s32 %s161, 1
      %p165 = scmp.eq.s32.totalorder %s22, 1
      %p166 = scmp.ne.s32.totalorder %s161, %s163
      %p167 = scmp.eq.s32.totalorder %s22, 0
      %p168 = por %p166, %p167
      %p169 = scmp.ne.s32.totalorder %s161, %s163
      %p170 = scmp.eq.s32.totalorder %s27, 1
      %p171 = por %p169, %p170
      %p172 = scmp.ne.s32.totalorder %s163, %s164
      %p173 = scmp.eq.s32.totalorder %s27, 0
      %p174 = por %p172, %p173
      %p175 = scmp.ne.s32.totalorder %s163, %s164
      %p176 = scmp.eq.s32.totalorder %s28, 1
      %p177 = por %p175, %p176
      %p179 = scmp.ne.s32.totalorder %s164, %s178
      %p180 = scmp.eq.s32.totalorder %s28, 0
      %p181 = por %p179, %p180
      %s183 = sadd.s32 %s182, 1
      %p186 = scmp.eq.s32.totalorder %s22, 1
      %p187 = scmp.ne.s32.totalorder %s182, %s184
      %p188 = scmp.eq.s32.totalorder %s22, 0
      %p189 = por %p187, %p188
      %p190 = scmp.ne.s32.totalorder %s182, %s184
      %p191 = scmp.eq.s32.totalorder %s27, 1
      %p192 = por %p190, %p191
      %p193 = scmp.ne.s32.totalorder %s184, %s185
      %p194 = scmp.eq.s32.totalorder %s27, 0
      %p195 = por %p193, %p194
      %p196 = scmp.ne.s32.totalorder %s184, %s185
      %p197 = scmp.eq.s32.totalorder %s28, 1
      %p198 = por %p196, %p197
      %p200 = scmp.ne.s32.totalorder %s185, %s199
      %p201 = scmp.eq.s32.totalorder %s28, 0
      %p202 = por %p200, %p201
      %s203 = ssub.s32 %s22, %s29
      %p204 = scmp.eq.s32.totalorder %s203, 0
      %s206 = sadd.s32 %s205, 1
      %s207 = scalar_select %p204, %s205, %s206
      %p210 = pneg %p204
      %p211 = scmp.eq.s32.totalorder %s22, 1
      %p212 = por %p210, %p211
      %p213 = scmp.ne.s32.totalorder %s205, %s208
      %p214 = scmp.eq.s32.totalorder %s22, 0
      %p215 = por %p213, %p214
      %p216 = scmp.ne.s32.totalorder %s205, %s208
      %p217 = scmp.eq.s32.totalorder %s27, 1
      %p218 = por %p216, %p217
      %p219 = scmp.ne.s32.totalorder %s208, %s209
      %p220 = scmp.eq.s32.totalorder %s27, 0
      %p221 = por %p219, %p220
      %p222 = scmp.ne.s32.totalorder %s208, %s209
      %p223 = scmp.eq.s32.totalorder %s28, 1
      %p224 = por %p222, %p223
      %p226 = scmp.ne.s32.totalorder %s209, %s225
      %p227 = scmp.eq.s32.totalorder %s28, 0
      %p228 = por %p226, %p227
      %s229 = ssub.s32 %s22, %s29
      %p230 = scmp.eq.s32.totalorder %s229, 0
      %s232 = sadd.s32 %s231, 1
      %s233 = scalar_select %p230, %s231, %s232
      %p236 = pneg %p230
      %p237 = scmp.eq.s32.totalorder %s22, 1
      %p238 = por %p236, %p237
      %p239 = scmp.ne.s32.totalorder %s231, %s234
      %p240 = scmp.eq.s32.totalorder %s22, 0
      %p241 = por %p239, %p240
      %p242 = scmp.ne.s32.totalorder %s231, %s234
      %p243 = scmp.eq.s32.totalorder %s27, 1
      %p244 = por %p242, %p243
      %p245 = scmp.ne.s32.totalorder %s234, %s235
      %p246 = scmp.eq.s32.totalorder %s27, 0
      %p247 = por %p245, %p246
      %p248 = scmp.ne.s32.totalorder %s234, %s235
      %p249 = scmp.eq.s32.totalorder %s28, 1
      %p250 = por %p248, %p249
      %p252 = scmp.ne.s32.totalorder %s235, %s251
      %p253 = scmp.eq.s32.totalorder %s28, 0
      %p254 = por %p252, %p253
      %p255 = scmp.le.s32.totalorder 1, %s22
      %p256 = scmp.lt.s32.totalorder %s22, 3
      %p257 = pnand %p255, %p256
      %p258 = pneg %p257
      // Predicated region
      $region9: #{tpu_custom_call.1} parent=5 // pred_check
        _
      $region10: #{tpu_custom_call.1} parent=5 // pred_check_branch
        %260 = sbr.rel (%p257) target = $region12
      $region11: #{tpu_custom_call.1} parent=5 // pred_region
        %s261 = ssub.s32 %s22, 1
        // Predicated region
        $region13: #{tpu_custom_call.1} parent=11 // pred_check
          %p262 = pneg %p69
        $region14: #{tpu_custom_call.1} parent=11 // pred_check_branch
          %264 = sbr.rel (%p262) target = $region16
        $region15: #{tpu_custom_call.1} parent=11 // pred_region
          _
        $region16: #{tpu_custom_call.1} parent=11 // pred_fallthru
          _
        // Predicated region
        $region17: #{tpu_custom_call.1} parent=11 // pred_check
          %p265 = pneg %p90
        $region18: #{tpu_custom_call.1} parent=11 // pred_check_branch
          %267 = sbr.rel (%p265) target = $region20
        $region19: #{tpu_custom_call.1} parent=11 // pred_region
          _
        $region20: #{tpu_custom_call.1} parent=11 // pred_fallthru
          _
        // Predicated region
        $region21: #{tpu_custom_call.1} parent=11 // pred_check
          %p268 = pneg %p111
        $region22: #{tpu_custom_call.1} parent=11 // pred_check_branch
          %270 = sbr.rel (%p268) target = $region24
        $region23: #{tpu_custom_call.1} parent=11 // pred_region
          _
        $region24: #{tpu_custom_call.1} parent=11 // pred_fallthru
          _
        // Predicated region
        $region25: #{tpu_custom_call.1} parent=11 // pred_check
          %p271 = pneg %p132
        $region26: #{tpu_custom_call.1} parent=11 // pred_check_branch
          %273 = sbr.rel (%p271) target = $region28
        $region27: #{tpu_custom_call.1} parent=11 // pred_region
          _
        $region28: #{tpu_custom_call.1} parent=11 // pred_fallthru
          _
        // Predicated region
        $region29: #{tpu_custom_call.1} parent=11 // pred_check
          %p274 = pneg %p153
        $region30: #{tpu_custom_call.1} parent=11 // pred_check_branch
          %276 = sbr.rel (%p274) target = $region32
        $region31: #{tpu_custom_call.1} parent=11 // pred_region
          _
        $region32: #{tpu_custom_call.1} parent=11 // pred_fallthru
          _
        // Predicated region
        $region33: #{tpu_custom_call.1} parent=11 // pred_check
          %p277 = pneg %p174
        $region34: #{tpu_custom_call.1} parent=11 // pred_check_branch
          %279 = sbr.rel (%p277) target = $region36
        $region35: #{tpu_custom_call.1} parent=11 // pred_region
          _
        $region36: #{tpu_custom_call.1} parent=11 // pred_fallthru
          _
        // Predicated region
        $region37: #{tpu_custom_call.1} parent=11 // pred_check
          %p280 = pneg %p195
        $region38: #{tpu_custom_call.1} parent=11 // pred_check_branch
          %282 = sbr.rel (%p280) target = $region40
        $region39: #{tpu_custom_call.1} parent=11 // pred_region
          _
        $region40: #{tpu_custom_call.1} parent=11 // pred_fallthru
          _
      $region12: #{tpu_custom_call.1} parent=5 // pred_fallthru
        _
      %p283 = scmp.lt.s32.totalorder %s22, 2
      // Predicated region
      $region41: #{tpu_custom_call.1} parent=5 // pred_check
        %p284 = pneg %p283
      $region42: #{tpu_custom_call.1} parent=5 // pred_check_branch
        %286 = sbr.rel (%p284) target = $region44
      $region43: #{tpu_custom_call.1} parent=5 // pred_region
        // Predicated region
        $region45: #{tpu_custom_call.1} parent=43 // pred_check
          %p287 = pneg %p42
        $region46: #{tpu_custom_call.1} parent=43 // pred_check_branch
          %289 = sbr.rel (%p287) target = $region48
        $region47: #{tpu_custom_call.1} parent=43 // pred_region
          %p290 = scmp.lt.s32.totalorder %s22, 1
          %s291 = scalar_select %p290, %s22, 1
          %s292 = smul.addr %s291, 16
          %s293 = smul.addr %s292, 8
          %s294 = scalar_lea.vmem %s0, %s293
        $region48: #{tpu_custom_call.1} parent=43 // pred_fallthru
          _
      $region44: #{tpu_custom_call.1} parent=5 // pred_fallthru
        _
      %p295 = scmp.le.s32.totalorder 1, %s22
      %p296 = scmp.lt.s32.totalorder %s22, 3
      %p297 = pnand %p295, %p296
      %p298 = pneg %p297
      // Predicated region
      $region49: #{tpu_custom_call.1} parent=5 // pred_check
        _
      $region50: #{tpu_custom_call.1} parent=5 // pred_check_branch
        %300 = sbr.rel (%p297) target = $region52
      $region51: #{tpu_custom_call.1} parent=5 // pred_region
        %s301 = ssub.s32 %s22, 1
        %p302 = scmp.lt.s32.totalorder %s27, 1
        %s303 = scalar_select %p302, %s27, 1
        %s304 = smul.addr %s303, 16
        %s305 = smul.addr %s304, 8
        %s306 = scalar_lea.vmem %s0, %s305
        %p307 = pneg %p48
        %p308 = pneg %p45
        %p309 = pneg %p69
        %p310 = pneg %p66
        %p311 = pneg %p90
        %p312 = pneg %p87
        %p313 = pneg %p111
        %p314 = pneg %p108
        %p315 = pneg %p132
        %p316 = pneg %p129
        %p317 = pneg %p153
        %p318 = pneg %p150
        %p319 = pneg %p174
        %p320 = pneg %p171
        %p321 = pneg %p195
        %p322 = pneg %p192
        %p323 = pneg %p221
        %p324 = pneg %p218
        %s325 = sand.u32 %s208, 1
        %s326 = scalar_lea.sflag [#allocation3], %s325
        %s327 = sand.u32 %s208, 1
        %s328 = scalar_lea.vmem [#allocation2], %s327
        %p329 = pneg %p247
        %p330 = pneg %p244
        %s331 = sand.u32 %s234, 1
        %s332 = scalar_lea.sflag [#allocation5], %s331
        %s333 = sand.u32 %s234, 1
        %s334 = smul.addr %s333, 4
        %s335 = scalar_lea.vmem [#allocation4], %s334
        %p336 = scmp.lt.s32.totalorder %s27, 1
        %s337 = scalar_select %p336, %s27, 1
        %s338 = smul.addr %s337, 16
        %s339 = smul.addr %s338, 8
        %s340 = scalar_lea.vmem %s0, %s339
        %v341 = vld [vmem:[%s340] sm:$0xff]
        %v342 = vld [vmem:[%s340 + $0x8] sm:$0xff]
        %v343 = vld [vmem:[%s340 + $0x10] sm:$0xff]
        %v344 = vld [vmem:[%s340 + $0x18] sm:$0xff]
        %v345 = vld [vmem:[%s340 + $0x20] sm:$0xff]
        %v346 = vld [vmem:[%s340 + $0x28] sm:$0xff]
        %v347 = vld [vmem:[%s340 + $0x30] sm:$0xff]
        %v348 = vld [vmem:[%s340 + $0x38] sm:$0xff]
        %v349 = vld [vmem:[%s340 + $0x40] sm:$0xff]
        %v350 = vld [vmem:[%s340 + $0x48] sm:$0xff]
        %v351 = vld [vmem:[%s340 + $0x50] sm:$0xff]
        %v352 = vld [vmem:[%s340 + $0x58] sm:$0xff]
        %v353 = vld [vmem:[%s340 + $0x60] sm:$0xff]
        %v354 = vld [vmem:[%s340 + $0x68] sm:$0xff]
        %v355 = vld [vmem:[%s340 + $0x70] sm:$0xff]
        %v356 = vld [vmem:[%s340 + $0x78] sm:$0xff]
        %v357 = vld [vmem:[%s2] sm:$0xff]
        %v358 = vld [vmem:[%s2 + $0x8] sm:$0xff]
        %v359 = vld [vmem:[%s2 + $0x10] sm:$0xff]
        %v360 = vld [vmem:[%s2 + $0x18] sm:$0xff]
        %vm361 = vcmask 261120
        %v363 = vsel %vm361, %v341, 0
        %v366 = vsel %vm361, %v342, 0
        %v369 = vsel %vm361, %v343, 0
        %v372 = vsel %vm361, %v344, 0
        %v375 = vsel %vm361, %v345, 0
        %v378 = vsel %vm361, %v346, 0
        %v381 = vsel %vm361, %v347, 0
        %v384 = vsel %vm361, %v348, 0
        %v387 = vsel %vm361, %v349, 0
        %v390 = vsel %vm361, %v350, 0
        %v393 = vsel %vm361, %v351, 0
        %v396 = vsel %vm361, %v352, 0
        %v399 = vsel %vm361, %v353, 0
        %v402 = vsel %vm361, %v354, 0
        %v405 = vsel %vm361, %v355, 0
        %v408 = vsel %vm361, %v356, 0
        %410 = vmatprep.subr.mxu0 0.0
        %411 = vmatpush1.msra.mxu0 %v357
        %412 = vmatprep.subr.mxu0 0.0
        %413 = vmatpush1.msra.mxu0 %v358
        %414 = vmatprep.subr.mxu0 0.0
        %415 = vmatpush1.msra.mxu0 %v359
        %416 = vmatprep.subr.mxu0 0.0
        %417 = vmatpush1.msra.mxu0 %v360
        %418 = vmatprep.subr.mxu0 0.0
        %419 = vmatpush1.msra.mxu0 0.0
        %420 = vmatprep.subr.mxu0 0.0
        %421 = vmatpush1.msra.mxu0 0.0
        %422 = vmatprep.subr.mxu0 0.0
        %423 = vmatpush1.msra.mxu0 0.0
        %424 = vmatprep.subr.mxu0 0.0
        %425 = vmatpush1.msra.mxu0 0.0
        %426 = vmatprep.subr.mxu0 0.0
        %427 = vmatpush1.msra.mxu0 0.0
        %428 = vmatprep.subr.mxu0 0.0
        %429 = vmatpush1.msra.mxu0 0.0
        %430 = vmatprep.subr.mxu0 0.0
        %431 = vmatpush1.msra.mxu0 0.0
        %432 = vmatprep.subr.mxu0 0.0
        %433 = vmatpush1.msra.mxu0 0.0
        %434 = vmatprep.subr.mxu0 0.0
        %435 = vmatpush1.msra.mxu0 0.0
        %436 = vmatprep.subr.mxu0 0.0
        %437 = vmatpush1.msra.mxu0 0.0
        %438 = vmatprep.subr.mxu0 0.0
        %439 = vmatpush1.msra.mxu0 0.0
        %440 = vmatprep.subr.mxu0 0.0
        %441 = vmatpush1.msra.mxu0 0.0
        %442 = vmatprep.subr.mxu0 0.0
        %443 = vmatpush1.msra.mxu0 0.0
        %444 = vmatprep.subr.mxu0 0.0
        %445 = vmatpush1.msra.mxu0 0.0
        %446 = vmatprep.subr.mxu0 0.0
        %447 = vmatpush1.msra.mxu0 0.0
        %448 = vmatprep.subr.mxu0 0.0
        %449 = vmatpush1.msra.mxu0 0.0
        %450 = vmatprep.subr.mxu0 0.0
        %451 = vmatpush1.msra.mxu0 0.0
        %452 = vmatprep.subr.mxu0 0.0
        %453 = vmatpush1.msra.mxu0 0.0
        %454 = vmatprep.subr.mxu0 0.0
        %455 = vmatpush1.msra.mxu0 0.0
        %456 = vmatprep.subr.mxu0 0.0
        %457 = vmatpush1.msra.mxu0 0.0
        %458 = vmatprep.subr.mxu0 0.0
        %459 = vmatpush1.msra.mxu0 0.0
        %460 = vmatprep.subr.mxu0 0.0
        %461 = vmatpush1.msra.mxu0 0.0
        %462 = vmatprep.subr.mxu0 0.0
        %463 = vmatpush1.msra.mxu0 0.0
        %464 = vmatprep.subr.mxu0 0.0
        %465 = vmatpush1.msra.mxu0 0.0
        %466 = vmatprep.subr.mxu0 0.0
        %467 = vmatpush1.msra.mxu0 0.0
        %468 = vmatprep.subr.mxu0 0.0
        %469 = vmatpush1.msra.mxu0 0.0
        %470 = vmatprep.subr.mxu0 0.0
        %471 = vmatpush1.msra.mxu0 0.0
        %472 = vmatprep.subr.mxu0 0.0
        %473 = vmatpush1.msra.mxu0 0.0
        %474 = vmatprep.mubr.f32.mxu0 0.0
        %475 = vmatmul.mubr.f32.gmra.mrb[0].mxu0 %v363
        %v476 = vpop.f32.mrb[0].mxu0
        %v477 = vadd.f32 0.0, %v476
        %v478 = vpop.f32.mrb[0].mxu0
        %479 = vmatprep.mubr.f32.mxu0 0.0
        %480 = vmatmul.mubr.f32.gmra.mrb[0].mxu0 %v366
        %v481 = vpop.f32.mrb[0].mxu0
        %v482 = vadd.f32 0.0, %v481
        %v483 = vpop.f32.mrb[0].mxu0
        %484 = vmatprep.mubr.f32.mxu0 0.0
        %485 = vmatmul.mubr.f32.gmra.mrb[0].mxu0 %v369
        %v486 = vpop.f32.mrb[0].mxu0
        %v487 = vadd.f32 0.0, %v486
        %v488 = vpop.f32.mrb[0].mxu0
        %489 = vmatprep.mubr.f32.mxu0 0.0
        %490 = vmatmul.mubr.f32.gmra.mrb[0].mxu0 %v372
        %v491 = vpop.f32.mrb[0].mxu0
        %v492 = vadd.f32 0.0, %v491
        %v493 = vpop.f32.mrb[0].mxu0
        %494 = vmatprep.mubr.f32.mxu0 0.0
        %495 = vmatmul.mubr.f32.gmra.mrb[0].mxu0 %v375
        %v496 = vpop.f32.mrb[0].mxu0
        %v497 = vadd.f32 0.0, %v496
        %v498 = vpop.f32.mrb[0].mxu0
        %499 = vmatprep.mubr.f32.mxu0 0.0
        %500 = vmatmul.mubr.f32.gmra.mrb[0].mxu0 %v378
        %v501 = vpop.f32.mrb[0].mxu0
        %v502 = vadd.f32 0.0, %v501
        %v503 = vpop.f32.mrb[0].mxu0
        %504 = vmatprep.mubr.f32.mxu0 0.0
        %505 = vmatmul.mubr.f32.gmra.mrb[0].mxu0 %v381
        %v506 = vpop.f32.mrb[0].mxu0
        %v507 = vadd.f32 0.0, %v506
        %v508 = vpop.f32.mrb[0].mxu0
        %509 = vmatprep.mubr.f32.mxu0 0.0
        %510 = vmatmul.mubr.f32.gmra.mrb[0].mxu0 %v384
        %v511 = vpop.f32.mrb[0].mxu0
        %v512 = vadd.f32 0.0, %v511
        %v513 = vpop.f32.mrb[0].mxu0
        %514 = vmatprep.mubr.f32.mxu0 0.0
        %515 = vmatmul.mubr.f32.gmra.mrb[0].mxu0 %v387
        %v516 = vpop.f32.mrb[0].mxu0
        %v517 = vadd.f32 0.0, %v516
        %v518 = vpop.f32.mrb[0].mxu0
        %519 = vmatprep.mubr.f32.mxu0 0.0
        %520 = vmatmul.mubr.f32.gmra.mrb[0].mxu0 %v390
        %v521 = vpop.f32.mrb[0].mxu0
        %v522 = vadd.f32 0.0, %v521
        %v523 = vpop.f32.mrb[0].mxu0
        %524 = vmatprep.mubr.f32.mxu0 0.0
        %525 = vmatmul.mubr.f32.gmra.mrb[0].mxu0 %v393
        %v526 = vpop.f32.mrb[0].mxu0
        %v527 = vadd.f32 0.0, %v526
        %v528 = vpop.f32.mrb[0].mxu0
        %529 = vmatprep.mubr.f32.mxu0 0.0
        %530 = vmatmul.mubr.f32.gmra.mrb[0].mxu0 %v396
        %v531 = vpop.f32.mrb[0].mxu0
        %v532 = vadd.f32 0.0, %v531
        %v533 = vpop.f32.mrb[0].mxu0
        %534 = vmatprep.mubr.f32.mxu0 0.0
        %535 = vmatmul.mubr.f32.gmra.mrb[0].mxu0 %v399
        %v536 = vpop.f32.mrb[0].mxu0
        %v537 = vadd.f32 0.0, %v536
        %v538 = vpop.f32.mrb[0].mxu0
        %539 = vmatprep.mubr.f32.mxu0 0.0
        %540 = vmatmul.mubr.f32.gmra.mrb[0].mxu0 %v402
        %v541 = vpop.f32.mrb[0].mxu0
        %v542 = vadd.f32 0.0, %v541
        %v543 = vpop.f32.mrb[0].mxu0
        %544 = vmatprep.mubr.f32.mxu0 0.0
        %545 = vmatmul.mubr.f32.gmra.mrb[0].mxu0 %v405
        %v546 = vpop.f32.mrb[0].mxu0
        %v547 = vadd.f32 0.0, %v546
        %v548 = vpop.f32.mrb[0].mxu0
        %549 = vmatprep.mubr.f32.mxu0 0.0
        %550 = vmatmul.mubr.f32.gmra.mrb[0].mxu0 %v408
        %v551 = vpop.f32.mrb[0].mxu0
        %v552 = vadd.f32 0.0, %v551
        %v553 = vpop.f32.mrb[0].mxu0
        %554 = vdwg.mxu0
        %v555 = vld [vmem:[%s3] sm:$0xff]
        %v556 = vld [vmem:[%s3 + $0x8] sm:$0xff]
        %v557 = vld [vmem:[%s3 + $0x10] sm:$0xff]
        %v558 = vld [vmem:[%s3 + $0x18] sm:$0xff]
        %559 = vmatprep.subr.mxu0 0.0
        %560 = vmatpush1.msra.mxu0 %v555
        %561 = vmatprep.subr.mxu0 0.0
        %562 = vmatpush1.msra.mxu0 %v556
        %563 = vmatprep.subr.mxu0 0.0
        %564 = vmatpush1.msra.mxu0 %v557
        %565 = vmatprep.subr.mxu0 0.0
        %566 = vmatpush1.msra.mxu0 %v558
        %567 = vmatprep.subr.mxu0 0.0
        %568 = vmatpush1.msra.mxu0 0.0
        %569 = vmatprep.subr.mxu0 0.0
        %570 = vmatpush1.msra.mxu0 0.0
        %571 = vmatprep.subr.mxu0 0.0
        %572 = vmatpush1.msra.mxu0 0.0
        %573 = vmatprep.subr.mxu0 0.0
        %574 = vmatpush1.msra.mxu0 0.0
        %575 = vmatprep.subr.mxu0 0.0
        %576 = vmatpush1.msra.mxu0 0.0
        %577 = vmatprep.subr.mxu0 0.0
        %578 = vmatpush1.msra.mxu0 0.0
        %579 = vmatprep.subr.mxu0 0.0
        %580 = vmatpush1.msra.mxu0 0.0
        %581 = vmatprep.subr.mxu0 0.0
        %582 = vmatpush1.msra.mxu0 0.0
        %583 = vmatprep.subr.mxu0 0.0
        %584 = vmatpush1.msra.mxu0 0.0
        %585 = vmatprep.subr.mxu0 0.0
        %586 = vmatpush1.msra.mxu0 0.0
        %587 = vmatprep.subr.mxu0 0.0
        %588 = vmatpush1.msra.mxu0 0.0
        %589 = vmatprep.subr.mxu0 0.0
        %590 = vmatpush1.msra.mxu0 0.0
        %591 = vmatprep.subr.mxu0 0.0
        %592 = vmatpush1.msra.mxu0 0.0
        %593 = vmatprep.subr.mxu0 0.0
        %594 = vmatpush1.msra.mxu0 0.0
        %595 = vmatprep.subr.mxu0 0.0
        %596 = vmatpush1.msra.mxu0 0.0
        %597 = vmatprep.subr.mxu0 0.0
        %598 = vmatpush1.msra.mxu0 0.0
        %599 = vmatprep.subr.mxu0 0.0
        %600 = vmatpush1.msra.mxu0 0.0
        %601 = vmatprep.subr.mxu0 0.0
        %602 = vmatpush1.msra.mxu0 0.0
        %603 = vmatprep.subr.mxu0 0.0
        %604 = vmatpush1.msra.mxu0 0.0
        %605 = vmatprep.subr.mxu0 0.0
        %606 = vmatpush1.msra.mxu0 0.0
        %607 = vmatprep.subr.mxu0 0.0
        %608 = vmatpush1.msra.mxu0 0.0
        %609 = vmatprep.subr.mxu0 0.0
        %610 = vmatpush1.msra.mxu0 0.0
        %611 = vmatprep.subr.mxu0 0.0
        %612 = vmatpush1.msra.mxu0 0.0
        %613 = vmatprep.subr.mxu0 0.0
        %614 = vmatpush1.msra.mxu0 0.0
        %615 = vmatprep.subr.mxu0 0.0
        %616 = vmatpush1.msra.mxu0 0.0
        %617 = vmatprep.subr.mxu0 0.0
        %618 = vmatpush1.msra.mxu0 0.0
        %619 = vmatprep.subr.mxu0 0.0
        %620 = vmatpush1.msra.mxu0 0.0
        %621 = vmatprep.subr.mxu0 0.0
        %622 = vmatpush1.msra.mxu0 0.0
        %623 = vmatprep.mubr.f32.mxu0 0.0
        %624 = vmatmul.mubr.f32.gmra.mrb[0].mxu0 %v363
        %v625 = vpop.f32.mrb[0].mxu0
        %v626 = vadd.f32 0.0, %v625
        %v627 = vpop.f32.mrb[0].mxu0
        %628 = vmatprep.mubr.f32.mxu0 0.0
        %629 = vmatmul.mubr.f32.gmra.mrb[0].mxu0 %v366
        %v630 = vpop.f32.mrb[0].mxu0
        %v631 = vadd.f32 0.0, %v630
        %v632 = vpop.f32.mrb[0].mxu0
        %633 = vmatprep.mubr.f32.mxu0 0.0
        %634 = vmatmul.mubr.f32.gmra.mrb[0].mxu0 %v369
        %v635 = vpop.f32.mrb[0].mxu0
        %v636 = vadd.f32 0.0, %v635
        %v637 = vpop.f32.mrb[0].mxu0
        %638 = vmatprep.mubr.f32.mxu0 0.0
        %639 = vmatmul.mubr.f32.gmra.mrb[0].mxu0 %v372
        %v640 = vpop.f32.mrb[0].mxu0
        %v641 = vadd.f32 0.0, %v640
        %v642 = vpop.f32.mrb[0].mxu0
        %643 = vmatprep.mubr.f32.mxu0 0.0
        %644 = vmatmul.mubr.f32.gmra.mrb[0].mxu0 %v375
        %v645 = vpop.f32.mrb[0].mxu0
        %v646 = vadd.f32 0.0, %v645
        %v647 = vpop.f32.mrb[0].mxu0
        %648 = vmatprep.mubr.f32.mxu0 0.0
        %649 = vmatmul.mubr.f32.gmra.mrb[0].mxu0 %v378
        %v650 = vpop.f32.mrb[0].mxu0
        %v651 = vadd.f32 0.0, %v650
        %v652 = vpop.f32.mrb[0].mxu0
        %653 = vmatprep.mubr.f32.mxu0 0.0
        %654 = vmatmul.mubr.f32.gmra.mrb[0].mxu0 %v381
        %v655 = vpop.f32.mrb[0].mxu0
        %v656 = vadd.f32 0.0, %v655
        %v657 = vpop.f32.mrb[0].mxu0
        %658 = vmatprep.mubr.f32.mxu0 0.0
        %659 = vmatmul.mubr.f32.gmra.mrb[0].mxu0 %v384
        %v660 = vpop.f32.mrb[0].mxu0
        %v661 = vadd.f32 0.0, %v660
        %v662 = vpop.f32.mrb[0].mxu0
        %663 = vmatprep.mubr.f32.mxu0 0.0
        %664 = vmatmul.mubr.f32.gmra.mrb[0].mxu0 %v387
        %v665 = vpop.f32.mrb[0].mxu0
        %v666 = vadd.f32 0.0, %v665
        %v667 = vpop.f32.mrb[0].mxu0
        %668 = vmatprep.mubr.f32.mxu0 0.0
        %669 = vmatmul.mubr.f32.gmra.mrb[0].mxu0 %v390
        %v670 = vpop.f32.mrb[0].mxu0
        %v671 = vadd.f32 0.0, %v670
        %v672 = vpop.f32.mrb[0].mxu0
        %673 = vmatprep.mubr.f32.mxu0 0.0
        %674 = vmatmul.mubr.f32.gmra.mrb[0].mxu0 %v393
        %v675 = vpop.f32.mrb[0].mxu0
        %v676 = vadd.f32 0.0, %v675
        %v677 = vpop.f32.mrb[0].mxu0
        %678 = vmatprep.mubr.f32.mxu0 0.0
        %679 = vmatmul.mubr.f32.gmra.mrb[0].mxu0 %v396
        %v680 = vpop.f32.mrb[0].mxu0
        %v681 = vadd.f32 0.0, %v680
        %v682 = vpop.f32.mrb[0].mxu0
        %683 = vmatprep.mubr.f32.mxu0 0.0
        %684 = vmatmul.mubr.f32.gmra.mrb[0].mxu0 %v399
        %v685 = vpop.f32.mrb[0].mxu0
        %v686 = vadd.f32 0.0, %v685
        %v687 = vpop.f32.mrb[0].mxu0
        %688 = vmatprep.mubr.f32.mxu0 0.0
        %689 = vmatmul.mubr.f32.gmra.mrb[0].mxu0 %v402
        %v690 = vpop.f32.mrb[0].mxu0
        %v691 = vadd.f32 0.0, %v690
        %v692 = vpop.f32.mrb[0].mxu0
        %693 = vmatprep.mubr.f32.mxu0 0.0
        %694 = vmatmul.mubr.f32.gmra.mrb[0].mxu0 %v405
        %v695 = vpop.f32.mrb[0].mxu0
        %v696 = vadd.f32 0.0, %v695
        %v697 = vpop.f32.mrb[0].mxu0
        %698 = vmatprep.mubr.f32.mxu0 0.0
        %699 = vmatmul.mubr.f32.gmra.mrb[0].mxu0 %v408
        %v700 = vpop.f32.mrb[0].mxu0
        %v701 = vadd.f32 0.0, %v700
        %v702 = vpop.f32.mrb[0].mxu0
        %703 = vdwg.mxu0
        %v704 = vld [vmem:[%s1] sm:$0xff]
        %v705 = vld [vmem:[%s1 + $0x8] sm:$0xff]
        %v706 = vld [vmem:[%s1 + $0x10] sm:$0xff]
        %v707 = vld [vmem:[%s1 + $0x18] sm:$0xff]
        %708 = vmatprep.subr.mxu0 0.0
        %709 = vmatpush1.msra.mxu0 %v704
        %710 = vmatprep.subr.mxu0 0.0
        %711 = vmatpush1.msra.mxu0 %v705
        %712 = vmatprep.subr.mxu0 0.0
        %713 = vmatpush1.msra.mxu0 %v706
        %714 = vmatprep.subr.mxu0 0.0
        %715 = vmatpush1.msra.mxu0 %v707
        %716 = vmatprep.subr.mxu0 0.0
        %717 = vmatpush1.msra.mxu0 0.0
        %718 = vmatprep.subr.mxu0 0.0
        %719 = vmatpush1.msra.mxu0 0.0
        %720 = vmatprep.subr.mxu0 0.0
        %721 = vmatpush1.msra.mxu0 0.0
        %722 = vmatprep.subr.mxu0 0.0
        %723 = vmatpush1.msra.mxu0 0.0
        %724 = vmatprep.subr.mxu0 0.0
        %725 = vmatpush1.msra.mxu0 0.0
        %726 = vmatprep.subr.mxu0 0.0
        %727 = vmatpush1.msra.mxu0 0.0
        %728 = vmatprep.subr.mxu0 0.0
        %729 = vmatpush1.msra.mxu0 0.0
        %730 = vmatprep.subr.mxu0 0.0
        %731 = vmatpush1.msra.mxu0 0.0
        %732 = vmatprep.subr.mxu0 0.0
        %733 = vmatpush1.msra.mxu0 0.0
        %734 = vmatprep.subr.mxu0 0.0
        %735 = vmatpush1.msra.mxu0 0.0
        %736 = vmatprep.subr.mxu0 0.0
        %737 = vmatpush1.msra.mxu0 0.0
        %738 = vmatprep.subr.mxu0 0.0
        %739 = vmatpush1.msra.mxu0 0.0
        %740 = vmatprep.subr.mxu0 0.0
        %741 = vmatpush1.msra.mxu0 0.0
        %742 = vmatprep.subr.mxu0 0.0
        %743 = vmatpush1.msra.mxu0 0.0
        %744 = vmatprep.subr.mxu0 0.0
        %745 = vmatpush1.msra.mxu0 0.0
        %746 = vmatprep.subr.mxu0 0.0
        %747 = vmatpush1.msra.mxu0 0.0
        %748 = vmatprep.subr.mxu0 0.0
        %749 = vmatpush1.msra.mxu0 0.0
        %750 = vmatprep.subr.mxu0 0.0
        %751 = vmatpush1.msra.mxu0 0.0
        %752 = vmatprep.subr.mxu0 0.0
        %753 = vmatpush1.msra.mxu0 0.0
        %754 = vmatprep.subr.mxu0 0.0
        %755 = vmatpush1.msra.mxu0 0.0
        %756 = vmatprep.subr.mxu0 0.0
        %757 = vmatpush1.msra.mxu0 0.0
        %758 = vmatprep.subr.mxu0 0.0
        %759 = vmatpush1.msra.mxu0 0.0
        %760 = vmatprep.subr.mxu0 0.0
        %761 = vmatpush1.msra.mxu0 0.0
        %762 = vmatprep.subr.mxu0 0.0
        %763 = vmatpush1.msra.mxu0 0.0
        %764 = vmatprep.subr.mxu0 0.0
        %765 = vmatpush1.msra.mxu0 0.0
        %766 = vmatprep.subr.mxu0 0.0
        %767 = vmatpush1.msra.mxu0 0.0
        %768 = vmatprep.subr.mxu0 0.0
        %769 = vmatpush1.msra.mxu0 0.0
        %770 = vmatprep.subr.mxu0 0.0
        %771 = vmatpush1.msra.mxu0 0.0
        %772 = vmatprep.mubr.f32.mxu0 0.0
        %773 = vmatmul.mubr.f32.gmra.mrb[0].mxu0 %v363
        %v774 = vpop.f32.mrb[0].mxu0
        %v775 = vadd.f32 0.0, %v774
        %v776 = vpop.f32.mrb[0].mxu0
        %777 = vdwg.mxu0
        %v778 = vld [vmem:[%s6] sm:$0xf]
        %v779 = vlaneseq
        %v780 = vshrl.u32 %v779, 7
        %v781 = vsub.s32 0, %v780
        %v782 = vrot.slane %v775, %v781
        %v783 = vmul.f32 %v782, %v778
        %v785 = vsel %vm361, %v783, 0
        %v788 = vsel %vm361, %v477, 0
        %v791 = vsel %vm361, %v482, 0
        %v794 = vsel %vm361, %v487, 0
        %v797 = vsel %vm361, %v492, 0
        %v800 = vsel %vm361, %v497, 0
        %v803 = vsel %vm361, %v502, 0
        %v806 = vsel %vm361, %v507, 0
        %v809 = vsel %vm361, %v512, 0
        %v812 = vsel %vm361, %v517, 0
        %v815 = vsel %vm361, %v522, 0
        %v818 = vsel %vm361, %v527, 0
        %v821 = vsel %vm361, %v532, 0
        %v824 = vsel %vm361, %v537, 0
        %v827 = vsel %vm361, %v542, 0
        %v830 = vsel %vm361, %v547, 0
        %v833 = vsel %vm361, %v552, 0
        %835 = vmatprep.subr.mxu0 0.0
        %836 = vmatpush1.xpose.msra.mxu0 %v788
        %837 = vmatprep.subr.mxu0 0.0
        %838 = vmatpush1.xpose.msra.mxu0 %v791
        %839 = vmatprep.subr.mxu0 0.0
        %840 = vmatpush1.xpose.msra.mxu0 %v794
        %841 = vmatprep.subr.mxu0 0.0
        %842 = vmatpush1.xpose.msra.mxu0 %v797
        %843 = vmatprep.subr.mxu0 0.0
        %844 = vmatpush1.xpose.msra.mxu0 %v800
        %845 = vmatprep.subr.mxu0 0.0
        %846 = vmatpush1.xpose.msra.mxu0 %v803
        %847 = vmatprep.subr.mxu0 0.0
        %848 = vmatpush1.xpose.msra.mxu0 %v806
        %849 = vmatprep.subr.mxu0 0.0
        %850 = vmatpush1.xpose.msra.mxu0 %v809
        %851 = vmatprep.subr.mxu0 0.0
        %852 = vmatpush1.xpose.msra.mxu0 %v812
        %853 = vmatprep.subr.mxu0 0.0
        %854 = vmatpush1.xpose.msra.mxu0 %v815
        %855 = vmatprep.subr.mxu0 0.0
        %856 = vmatpush1.xpose.msra.mxu0 %v818
        %857 = vmatprep.subr.mxu0 0.0
        %858 = vmatpush1.xpose.msra.mxu0 %v821
        %859 = vmatprep.subr.mxu0 0.0
        %860 = vmatpush1.xpose.msra.mxu0 %v824
        %861 = vmatprep.subr.mxu0 0.0
        %862 = vmatpush1.xpose.msra.mxu0 %v827
        %863 = vmatprep.subr.mxu0 0.0
        %864 = vmatpush1.xpose.msra.mxu0 %v830
        %865 = vmatprep.subr.mxu0 0.0
        %866 = vmatpush1.xpose.msra.mxu0 %v833
        %867 = vmatprep.subr.mxu0 0.0
        %868 = vmatpush1.xpose.msra.mxu0 0.0
        %869 = vmatprep.subr.mxu0 0.0
        %870 = vmatpush1.xpose.msra.mxu0 0.0
        %871 = vmatprep.subr.mxu0 0.0
        %872 = vmatpush1.xpose.msra.mxu0 0.0
        %873 = vmatprep.subr.mxu0 0.0
        %874 = vmatpush1.xpose.msra.mxu0 0.0
        %875 = vmatprep.subr.mxu0 0.0
        %876 = vmatpush1.xpose.msra.mxu0 0.0
        %877 = vmatprep.subr.mxu0 0.0
        %878 = vmatpush1.xpose.msra.mxu0 0.0
        %879 = vmatprep.subr.mxu0 0.0
        %880 = vmatpush1.xpose.msra.mxu0 0.0
        %881 = vmatprep.subr.mxu0 0.0
        %882 = vmatpush1.xpose.msra.mxu0 0.0
        %883 = vmatprep.subr.mxu0 0.0
        %884 = vmatpush1.xpose.msra.mxu0 0.0
        %885 = vmatprep.subr.mxu0 0.0
        %886 = vmatpush1.xpose.msra.mxu0 0.0
        %887 = vmatprep.subr.mxu0 0.0
        %888 = vmatpush1.xpose.msra.mxu0 0.0
        %889 = vmatprep.subr.mxu0 0.0
        %890 = vmatpush1.xpose.msra.mxu0 0.0
        %891 = vmatprep.subr.mxu0 0.0
        %892 = vmatpush1.xpose.msra.mxu0 0.0
        %893 = vmatprep.subr.mxu0 0.0
        %894 = vmatpush1.xpose.msra.mxu0 0.0
        %895 = vmatprep.subr.mxu0 0.0
        %896 = vmatpush1.xpose.msra.mxu0 0.0
        %897 = vmatprep.subr.mxu0 0.0
        %898 = vmatpush1.xpose.msra.mxu0 0.0
        %899 = vmatprep.mubr.f32.mxu0 0.0
        %900 = vmatmul.mubr.f32.gmra.mrb[0].mxu0 %v785
        %v901 = vpop.f32.mrb[0].mxu0
        %v902 = vadd.f32 0.0, %v901
        %v903 = vpop.f32.mrb[0].mxu0
        %904 = vdwg.mxu0
        %905 = vst [vmem:[%s335] sm:$0xf] %v902
        %v906 = vld [vmem:[%s7] sm:$0x1]
        %v908 = vlaneseq
        %v909 = vshrl.u32 %v908, 7
        %v910 = vsub.s32 0, %v909
        %v911 = vrot.slane %v906, %v910
        %v913 = vadd.f32 %v902, %v911
        %vm914 = vcmask 1043456
        %v915 = vsel %vm914, %v913, -inf
        %916 = vmax.xlane.f32.xlu0 %v915
        %v917 = vpop.xlane.xlu0 %916
        %v918 = vsub.f32 %v913, %v917
        %v919 = vmul.f32 %v918, 1.442695
        %v920 = vpow.pop %v919
        %v921 = vsel %vm914, %v920, 0.0
        %922 = vadd.xlane.f32.xlu0 %v921
        %v923 = vpop.xlane.xlu0 %922
        %v924 = vrcp.pop %v923
        %v925 = vmul.f32 %v920, %v924
        %926 = vmatprep.subr.mxu0 0.0
        %927 = vmatpush1.msra.mxu0 %v626
        %928 = vmatprep.subr.mxu0 0.0
        %929 = vmatpush1.msra.mxu0 %v631
        %930 = vmatprep.subr.mxu0 0.0
        %931 = vmatpush1.msra.mxu0 %v636
        %932 = vmatprep.subr.mxu0 0.0
        %933 = vmatpush1.msra.mxu0 %v641
        %934 = vmatprep.subr.mxu0 0.0
        %935 = vmatpush1.msra.mxu0 %v646
        %936 = vmatprep.subr.mxu0 0.0
        %937 = vmatpush1.msra.mxu0 %v651
        %938 = vmatprep.subr.mxu0 0.0
        %939 = vmatpush1.msra.mxu0 %v656
        %940 = vmatprep.subr.mxu0 0.0
        %941 = vmatpush1.msra.mxu0 %v661
        %942 = vmatprep.subr.mxu0 0.0
        %943 = vmatpush1.msra.mxu0 %v666
        %944 = vmatprep.subr.mxu0 0.0
        %945 = vmatpush1.msra.mxu0 %v671
        %946 = vmatprep.subr.mxu0 0.0
        %947 = vmatpush1.msra.mxu0 %v676
        %948 = vmatprep.subr.mxu0 0.0
        %949 = vmatpush1.msra.mxu0 %v681
        %950 = vmatprep.subr.mxu0 0.0
        %951 = vmatpush1.msra.mxu0 %v686
        %952 = vmatprep.subr.mxu0 0.0
        %953 = vmatpush1.msra.mxu0 %v691
        %954 = vmatprep.subr.mxu0 0.0
        %955 = vmatpush1.msra.mxu0 %v696
        %956 = vmatprep.subr.mxu0 0.0
        %957 = vmatpush1.msra.mxu0 %v701
        %958 = vmatprep.subr.mxu0 0.0
        %959 = vmatpush1.msra.mxu0 0.0
        %960 = vmatprep.subr.mxu0 0.0
        %961 = vmatpush1.msra.mxu0 0.0
        %962 = vmatprep.subr.mxu0 0.0
        %963 = vmatpush1.msra.mxu0 0.0
        %964 = vmatprep.subr.mxu0 0.0
        %965 = vmatpush1.msra.mxu0 0.0
        %966 = vmatprep.subr.mxu0 0.0
        %967 = vmatpush1.msra.mxu0 0.0
        %968 = vmatprep.subr.mxu0 0.0
        %969 = vmatpush1.msra.mxu0 0.0
        %970 = vmatprep.subr.mxu0 0.0
        %971 = vmatpush1.msra.mxu0 0.0
        %972 = vmatprep.subr.mxu0 0.0
        %973 = vmatpush1.msra.mxu0 0.0
        %974 = vmatprep.subr.mxu0 0.0
        %975 = vmatpush1.msra.mxu0 0.0
        %976 = vmatprep.subr.mxu0 0.0
        %977 = vmatpush1.msra.mxu0 0.0
        %978 = vmatprep.subr.mxu0 0.0
        %979 = vmatpush1.msra.mxu0 0.0
        %980 = vmatprep.subr.mxu0 0.0
        %981 = vmatpush1.msra.mxu0 0.0
        %982 = vmatprep.subr.mxu0 0.0
        %983 = vmatpush1.msra.mxu0 0.0
        %984 = vmatprep.subr.mxu0 0.0
        %985 = vmatpush1.msra.mxu0 0.0
        %986 = vmatprep.subr.mxu0 0.0
        %987 = vmatpush1.msra.mxu0 0.0
        %988 = vmatprep.subr.mxu0 0.0
        %989 = vmatpush1.msra.mxu0 0.0
        %990 = vmatprep.mubr.f32.mxu0 0.0
        %991 = vmatmul.mubr.f32.gmra.mrb[0].mxu0 %v925
        %v992 = vpop.f32.mrb[0].mxu0
        %v993 = vadd.f32 0.0, %v992
        %v994 = vpop.f32.mrb[0].mxu0
        %995 = vdwg.mxu0
        %v996 = vmul.f32 %v993, %v778
        %vm997 = vcmask 257024
        %v998 = vsel %vm997, %v996, 0.0
        %v999 = vrot.slane %v998, 4
        %v1000 = vadd.f32 %v998, %v999
        %v1001 = vrot.slane %v1000, 2
        %v1002 = vadd.f32 %v1000, %v1001
        %v1003 = vrot.slane %v1002, 1
        %v1004 = vadd.f32 %v1002, %v1003
        %v1005 = vld [vmem:[%s4] sm:$0xff]
        %v1006 = vld [vmem:[%s4 + $0x8] sm:$0xff]
        %v1007 = vld [vmem:[%s4 + $0x10] sm:$0xff]
        %v1008 = vld [vmem:[%s4 + $0x18] sm:$0xff]
        %v1009 = vld [vmem:[%s5] sm:$0x1]
        %v1011 = vsel %vm361, %v1004, 0
        %1013 = vmatprep.subr.mxu0 0.0
        %1014 = vmatpush1.msra.mxu0 %v1005
        %1015 = vmatprep.subr.mxu0 0.0
        %1016 = vmatpush1.msra.mxu0 %v1006
        %1017 = vmatprep.subr.mxu0 0.0
        %1018 = vmatpush1.msra.mxu0 %v1007
        %1019 = vmatprep.subr.mxu0 0.0
        %1020 = vmatpush1.msra.mxu0 %v1008
        %1021 = vmatprep.subr.mxu0 0.0
        %1022 = vmatpush1.msra.mxu0 0.0
        %1023 = vmatprep.subr.mxu0 0.0
        %1024 = vmatpush1.msra.mxu0 0.0
        %1025 = vmatprep.subr.mxu0 0.0
        %1026 = vmatpush1.msra.mxu0 0.0
        %1027 = vmatprep.subr.mxu0 0.0
        %1028 = vmatpush1.msra.mxu0 0.0
        %1029 = vmatprep.subr.mxu0 0.0
        %1030 = vmatpush1.msra.mxu0 0.0
        %1031 = vmatprep.subr.mxu0 0.0
        %1032 = vmatpush1.msra.mxu0 0.0
        %1033 = vmatprep.subr.mxu0 0.0
        %1034 = vmatpush1.msra.mxu0 0.0
        %1035 = vmatprep.subr.mxu0 0.0
        %1036 = vmatpush1.msra.mxu0 0.0
        %1037 = vmatprep.subr.mxu0 0.0
        %1038 = vmatpush1.msra.mxu0 0.0
        %1039 = vmatprep.subr.mxu0 0.0
        %1040 = vmatpush1.msra.mxu0 0.0
        %1041 = vmatprep.subr.mxu0 0.0
        %1042 = vmatpush1.msra.mxu0 0.0
        %1043 = vmatprep.subr.mxu0 0.0
        %1044 = vmatpush1.msra.mxu0 0.0
        %1045 = vmatprep.subr.mxu0 0.0
        %1046 = vmatpush1.msra.mxu0 0.0
        %1047 = vmatprep.subr.mxu0 0.0
        %1048 = vmatpush1.msra.mxu0 0.0
        %1049 = vmatprep.subr.mxu0 0.0
        %1050 = vmatpush1.msra.mxu0 0.0
        %1051 = vmatprep.subr.mxu0 0.0
        %1052 = vmatpush1.msra.mxu0 0.0
        %1053 = vmatprep.subr.mxu0 0.0
        %1054 = vmatpush1.msra.mxu0 0.0
        %1055 = vmatprep.subr.mxu0 0.0
        %1056 = vmatpush1.msra.mxu0 0.0
        %1057 = vmatprep.subr.mxu0 0.0
        %1058 = vmatpush1.msra.mxu0 0.0
        %1059 = vmatprep.subr.mxu0 0.0
        %1060 = vmatpush1.msra.mxu0 0.0
        %1061 = vmatprep.subr.mxu0 0.0
        %1062 = vmatpush1.msra.mxu0 0.0
        %1063 = vmatprep.subr.mxu0 0.0
        %1064 = vmatpush1.msra.mxu0 0.0
        %1065 = vmatprep.subr.mxu0 0.0
        %1066 = vmatpush1.msra.mxu0 0.0
        %1067 = vmatprep.subr.mxu0 0.0
        %1068 = vmatpush1.msra.mxu0 0.0
        %1069 = vmatprep.subr.mxu0 0.0
        %1070 = vmatpush1.msra.mxu0 0.0
        %1071 = vmatprep.subr.mxu0 0.0
        %1072 = vmatpush1.msra.mxu0 0.0
        %1073 = vmatprep.subr.mxu0 0.0
        %1074 = vmatpush1.msra.mxu0 0.0
        %1075 = vmatprep.subr.mxu0 0.0
        %1076 = vmatpush1.msra.mxu0 0.0
        %1077 = vmatprep.mubr.f32.mxu0 0.0
        %1078 = vmatmul.mubr.f32.gmra.mrb[0].mxu0 %v1011
        %v1079 = vpop.f32.mrb[0].mxu0
        %v1080 = vadd.f32 %v1009, %v1079
        %v1081 = vpop.f32.mrb[0].mxu0
        %1082 = vdwg.mxu0
        %vm1083 = vcmask 253952
        %1084 = vst.msk [vmem:[%s328] sm:$0x1] %vm1083, %v1080
        %s1085 = sand.u32 %s208, 1
        %s1086 = scalar_lea.sflag [#allocation3], %s1085
        %s1087 = sand.u32 %s208, 1
        %s1088 = scalar_lea.vmem [#allocation2], %s1087
        %s1089 = sand.u32 %s234, 1
        %s1090 = scalar_lea.sflag [#allocation5], %s1089
        %s1091 = sand.u32 %s234, 1
        %s1092 = smul.addr %s1091, 4
        %s1093 = scalar_lea.vmem [#allocation4], %s1092
        // Predicated region
        $region53: #{tpu_custom_call.1} parent=51 // pred_check
          %p1094 = pneg %p218
        $region54: #{tpu_custom_call.1} parent=51 // pred_check_branch
          %1096 = sbr.rel (%p1094) target = $region56
        $region55: #{tpu_custom_call.1} parent=51 // pred_region
          %s1098 = ssub.s32 16, 16
          %1099 = vsyncadd %s1086, %s1098
          %s1100 = smul.addr %s27, 16
          %s1101 = scalar_lea.hbm %s8, %s1100
          %s1103 = sshll.u32 %s1088, 4
          %s1104 = int_to_ptr.vmem [resolvable:$true] %s1103
          %1106 = dma.vmem_to_hbm [thread:$0]  %s1104, 16, %s1101, %s1086
        $region56: #{tpu_custom_call.1} parent=51 // pred_fallthru
          _
        // Predicated region
        $region57: #{tpu_custom_call.1} parent=51 // pred_check
          %p1107 = pneg %p244
        $region58: #{tpu_custom_call.1} parent=51 // pred_check_branch
          %1109 = sbr.rel (%p1107) target = $region60
        $region59: #{tpu_custom_call.1} parent=51 // pred_region
          %s1111 = ssub.s32 64, 64
          %1112 = vsyncadd %s1090, %s1111
          %s1113 = smul.addr %s27, 64
          %s1114 = scalar_lea.hbm %s9, %s1113
          %s1116 = sshll.u32 %s1093, 4
          %s1117 = int_to_ptr.vmem [resolvable:$true] %s1116
          %1119 = dma.vmem_to_hbm [thread:$0]  %s1117, 64, %s1114, %s1090
        $region60: #{tpu_custom_call.1} parent=51 // pred_fallthru
          _
      $region52: #{tpu_custom_call.1} parent=5 // pred_fallthru
        _
      %p1120 = scmp.le.s32.totalorder 2, %s22
      // Predicated region
      $region61: #{tpu_custom_call.1} parent=5 // pred_check
        %p1121 = pneg %p1120
      $region62: #{tpu_custom_call.1} parent=5 // pred_check_branch
        %1123 = sbr.rel (%p1121) target = $region64
      $region63: #{tpu_custom_call.1} parent=5 // pred_region
        %s1124 = ssub.s32 %s22, 2
        // Predicated region
        $region65: #{tpu_custom_call.1} parent=63 // pred_check
          %p1125 = pneg %p224
        $region66: #{tpu_custom_call.1} parent=63 // pred_check_branch
          %1127 = sbr.rel (%p1125) target = $region68
        $region67: #{tpu_custom_call.1} parent=63 // pred_region
          %s1128 = sand.u32 %s209, 1
          %s1129 = scalar_lea.sflag [#allocation3], %s1128
          %s1130 = sand.u32 %s209, 1
          %s1131 = scalar_lea.vmem [#allocation2], %s1130
          %1132 = dma.done %s1129, 16
        $region68: #{tpu_custom_call.1} parent=63 // pred_fallthru
          _
        // Predicated region
        $region69: #{tpu_custom_call.1} parent=63 // pred_check
          %p1133 = pneg %p250
        $region70: #{tpu_custom_call.1} parent=63 // pred_check_branch
          %1135 = sbr.rel (%p1133) target = $region72
        $region71: #{tpu_custom_call.1} parent=63 // pred_region
          %s1136 = sand.u32 %s235, 1
          %s1137 = scalar_lea.sflag [#allocation5], %s1136
          %s1138 = sand.u32 %s235, 1
          %s1139 = smul.addr %s1138, 4
          %s1140 = scalar_lea.vmem [#allocation4], %s1139
          %1141 = dma.done %s1137, 64
        $region72: #{tpu_custom_call.1} parent=63 // pred_fallthru
          _
      $region64: #{tpu_custom_call.1} parent=5 // pred_fallthru
        _
    $region6: #{tpu_custom_call.1} parent=1 // loop_footer
      %s26 = sadd.s32 1, %s22
    $region7: #{tpu_custom_call.1} parent=1 // loop_footer_branch
      %21 = sbr.rel target = $region3
    $region8: #{tpu_custom_call.1} parent=1 // loop_exit
      _
    %1142 = vsyncpa [#allocation3], 1
    %s1143 = scalar_lea.sflag [#allocation3], 1
    %1144 = vsyncpa %s1143, 1
    %1145 = vsyncpa [#allocation5], 1
    %s1146 = scalar_lea.sflag [#allocation5], 1
    %1147 = vsyncpa %s1146, 1

</llo_original>
